<compile_context>
chip_gen: v7x
topology: tpu7x:2x2x1
jax: 0.10.0
libtpu: 0.0.40
codegen_flags: <defaults>
</compile_context>

<pallas_src>
import jax
import jax.numpy as jnp
from jax.experimental import pallas as pl
from jax.experimental.pallas import tpu as pltpu

LN_EPS = 1e-5  # torch.nn.LayerNorm default


def _layernorm_kernel(x_ref, g_ref, b_ref, o_ref):
    # x_ref: (TR, D) tile of rows; g_ref/b_ref: (1, D) affine params.
    x = x_ref[...].astype(jnp.float32)
    d = x.shape[-1]
    inv_d = jnp.float32(1.0 / d)
    # One pass: sum and sum-of-squares reductions are independent (can overlap
    # on the XLU) instead of the serial centered two-pass formulation.
    s = jnp.sum(x, axis=-1, keepdims=True)
    sq = jnp.sum(x * x, axis=-1, keepdims=True)
    mean = s * inv_d
    var = jnp.maximum(sq * inv_d - mean * mean, 0.0)  # clamp guards cancellation
    inv = jax.lax.rsqrt(var + LN_EPS)
    g = g_ref[...].astype(jnp.float32)
    b = b_ref[...].astype(jnp.float32)
    o_ref[...] = ((x - mean) * inv * g + b).astype(o_ref.dtype)


def _choose_row_tile(rows, d, itemsize):
    """Biggest row tile that keeps in+out double-buffered VMEM comfortably small.

    Target ~4 MiB per input block => ~16 MiB with double-buffered input+output,
    which fits the scoped VMEM budget on v5e (16 MiB default raised to 32 MiB),
    v6e (32 MiB of 128 MiB) and v7x (32 MiB of 64 MiB).
    """
    budget_bytes = 4 * 1024 * 1024
    tile = budget_bytes // max(d * itemsize, 1)
    tile = max(8, min(tile, 2048))
    tile = (tile // 8) * 8
    rows_up = ((rows + 7) // 8) * 8  # no point exceeding the (8-rounded) row count
    return max(8, min(tile, rows_up))


@jax.jit
def layernorm_pallas(x, gamma, beta):
    """LayerNorm over the last axis of x (any leading shape), via Pallas."""
    orig_shape = x.shape
    d = orig_shape[-1]
    x2d = x.reshape(-1, d)
    rows = x2d.shape[0]

    row_tile = _choose_row_tile(rows, d, x2d.dtype.itemsize)
    grid = (pl.cdiv(rows, row_tile),)  # ragged last block handled by Pallas

    g2d = gamma.reshape(1, d)
    b2d = beta.reshape(1, d)

    out = pl.pallas_call(
        _layernorm_kernel,
        out_shape=jax.ShapeDtypeStruct((rows, d), x.dtype),
        grid_spec=pltpu.PrefetchScalarGridSpec(
            num_scalar_prefetch=0,
            grid=grid,
            in_specs=[
                pl.BlockSpec((row_tile, d), lambda i: (i, 0)),
                pl.BlockSpec((1, d), lambda i: (0, 0)),
                pl.BlockSpec((1, d), lambda i: (0, 0)),
            ],
            out_specs=pl.BlockSpec((row_tile, d), lambda i: (i, 0)),
        ),
        compiler_params=pltpu.CompilerParams(
            dimension_semantics=("parallel",),
            vmem_limit_bytes=32 * 1024 * 1024,
        ),
    )(x2d, g2d, b2d)

    return out.reshape(orig_shape)


class PreNormPallas:
    """JAX/Pallas equivalent of the PyTorch PreNorm module."""

    def __init__(self, dim, fn, context_dim=None):
        self.fn = fn
        # nn.LayerNorm default init: weight=1, bias=0.
        self.norm_gamma = jnp.ones((dim,), jnp.float32)
        self.norm_beta = jnp.zeros((dim,), jnp.float32)
        self.has_context_norm = context_dim is not None
        if self.has_context_norm:
            self.ctx_gamma = jnp.ones((context_dim,), jnp.float32)
            self.ctx_beta = jnp.zeros((context_dim,), jnp.float32)

    def __call__(self, x, **kwargs):
        x = layernorm_pallas(x, self.norm_gamma, self.norm_beta)
        if self.has_context_norm:
            context = kwargs["context"]
            normed_context = layernorm_pallas(context, self.ctx_gamma, self.ctx_beta)
            kwargs.update(context=normed_context)
        return self.fn(x, **kwargs)


if __name__ == "__main__":
    key = jax.random.PRNGKey(0)
    k_x, k_ctx, k_w = jax.random.split(key, 3)

    B, N, DIM = 2, 8, 32          # latent array
    M, CTX_DIM = 16, 64           # context array

    x = jax.random.normal(k_x, (B, N, DIM), dtype=jnp.float32)
    context = jax.random.normal(k_ctx, (B, M, CTX_DIM), dtype=jnp.float32)

    # Representative wrapped `fn`: a deterministic Linear on the normed latents
    # that also consumes the normed context (mean-pooled), mirroring how
    # PreNorm hands both to an attention block in Perceiver IO.
    W = jax.random.normal(k_w, (DIM, DIM), dtype=jnp.float32) * 0.02
    Wc = jax.random.normal(k_w, (CTX_DIM, DIM), dtype=jnp.float32) * 0.02

    def fn(x, context=None):
        out = jnp.einsum("bnd,de->bne", x, W)
        if context is not None:
            ctx_feat = jnp.einsum("bmd,de->be", context, Wc) / context.shape[1]
            out = out + ctx_feat[:, None, :]
        return out

    prenorm = PreNormPallas(DIM, fn, context_dim=CTX_DIM)
    out = prenorm(x, context=context)
    jax.block_until_ready(out)

    # Reference check against plain-JAX LayerNorm.
    def ln_ref(v, g, b):
        mu = v.mean(-1, keepdims=True)
        var = ((v - mu) ** 2).mean(-1, keepdims=True)
        return (v - mu) * jax.lax.rsqrt(var + LN_EPS) * g + b

    ref = fn(ln_ref(x, prenorm.norm_gamma, prenorm.norm_beta),
             context=ln_ref(context, prenorm.ctx_gamma, prenorm.ctx_beta))
    assert jnp.allclose(out, ref, atol=1e-4, rtol=1e-4)
    assert out.shape == (B, N, DIM)

    print("KERNEL_OK")
</pallas_src>

<mosaic_0001>
module attributes {stable_mosaic.version = 11 : i64} {
  func.func @_layernorm_kernel(%arg0: i32, %arg1: memref<16x32xf32, #tpu.memory_space<vmem>>, %arg2: memref<1x32xf32, #tpu.memory_space<vmem>>, %arg3: memref<1x32xf32, #tpu.memory_space<vmem>>, %arg4: memref<16x32xf32, #tpu.memory_space<vmem>>) attributes {dimension_semantics = [#tpu.dimension_semantics<parallel>], iteration_bounds = array<i64: 1>, scalar_prefetch = 0 : i64, scratch_operands = 0 : i64, tpu.core_type = #tpu.core_type<tc>, window_params = [{transform_indices = @transform_0, window_bounds = array<i64: 16, 32>}, {pipeline_mode = #tpu.pipeline_mode<synchronous>, transform_indices = @transform_1, window_bounds = array<i64: 1, 32>}, {pipeline_mode = #tpu.pipeline_mode<synchronous>, transform_indices = @transform_2, window_bounds = array<i64: 1, 32>}, {transform_indices = @transform_3, window_bounds = array<i64: 16, 32>}]} {
    %c0 = arith.constant 0 : index
    %c0_0 = arith.constant 0 : index
    %0 = vector.load %arg1[%c0, %c0_0] : memref<16x32xf32, #tpu.memory_space<vmem>>, vector<16x32xf32>
    %cst = arith.constant dense<0.000000e+00> : vector<16xf32>
    %1 = vector.multi_reduction <add>, %0, %cst [1] : vector<16x32xf32> to vector<16xf32>
    %2 = vector.shape_cast %1 : vector<16xf32> to vector<16x1xf32>
    %3 = arith.mulf %0, %0 : vector<16x32xf32>
    %cst_1 = arith.constant dense<0.000000e+00> : vector<16xf32>
    %4 = vector.multi_reduction <add>, %3, %cst_1 [1] : vector<16x32xf32> to vector<16xf32>
    %5 = vector.shape_cast %4 : vector<16xf32> to vector<16x1xf32>
    %cst_2 = arith.constant 3.125000e-02 : f32
    %6 = vector.broadcast %cst_2 : f32 to vector<16x1xf32>
    %7 = arith.mulf %2, %6 : vector<16x1xf32>
    %cst_3 = arith.constant 3.125000e-02 : f32
    %8 = vector.broadcast %cst_3 : f32 to vector<16x1xf32>
    %9 = arith.mulf %5, %8 : vector<16x1xf32>
    %10 = arith.mulf %7, %7 : vector<16x1xf32>
    %11 = arith.subf %9, %10 : vector<16x1xf32>
    %cst_4 = arith.constant 0.000000e+00 : f32
    %12 = vector.broadcast %cst_4 : f32 to vector<16x1xf32>
    %13 = arith.maximumf %11, %12 : vector<16x1xf32>
    %cst_5 = arith.constant 9.99999974E-6 : f32
    %14 = vector.broadcast %cst_5 : f32 to vector<16x1xf32>
    %15 = arith.addf %13, %14 : vector<16x1xf32>
    %16 = math.rsqrt %15 : vector<16x1xf32>
    %c0_6 = arith.constant 0 : index
    %c0_7 = arith.constant 0 : index
    %17 = vector.load %arg2[%c0_6, %c0_7] : memref<1x32xf32, #tpu.memory_space<vmem>>, vector<1x32xf32>
    %c0_8 = arith.constant 0 : index
    %c0_9 = arith.constant 0 : index
    %18 = vector.load %arg3[%c0_8, %c0_9] : memref<1x32xf32, #tpu.memory_space<vmem>>, vector<1x32xf32>
    %19 = vector.broadcast %7 : vector<16x1xf32> to vector<16x32xf32>
    %20 = arith.subf %0, %19 : vector<16x32xf32>
    %21 = vector.broadcast %16 : vector<16x1xf32> to vector<16x32xf32>
    %22 = arith.mulf %20, %21 : vector<16x32xf32>
    %23 = vector.broadcast %17 : vector<1x32xf32> to vector<16x32xf32>
    %24 = arith.mulf %22, %23 : vector<16x32xf32>
    %25 = vector.broadcast %18 : vector<1x32xf32> to vector<16x32xf32>
    %26 = arith.addf %24, %25 : vector<16x32xf32>
    %c0_10 = arith.constant 0 : index
    %c0_11 = arith.constant 0 : index
    %27 = vector.load %arg4[%c0_10, %c0_11] : memref<16x32xf32, #tpu.memory_space<vmem>>, vector<16x32xf32>
    tpu.vector_store %arg4[%c0_10, %c0_11], %26 {strides = array<i32>} : memref<16x32xf32, #tpu.memory_space<vmem>>, vector<16x32xf32>,
    return
  }
  func.func @transform_0(%arg0: i32) -> (i32, i32) {
    %c0_i32 = arith.constant 0 : i32
    %c0_i32_0 = arith.constant 0 : i32
    return %arg0, %c0_i32 : i32, i32
  }
  func.func @transform_1(%arg0: i32) -> (i32, i32) {
    %c0_i32 = arith.constant 0 : i32
    %c0_i32_0 = arith.constant 0 : i32
    %c0_i32_1 = arith.constant 0 : i32
    return %c0_i32, %c0_i32_0 : i32, i32
  }
  func.func @transform_2(%arg0: i32) -> (i32, i32) {
    %c0_i32 = arith.constant 0 : i32
    %c0_i32_0 = arith.constant 0 : i32
    %c0_i32_1 = arith.constant 0 : i32
    return %c0_i32, %c0_i32_0 : i32, i32
  }
  func.func @transform_3(%arg0: i32) -> (i32, i32) {
    %c0_i32 = arith.constant 0 : i32
    %c0_i32_0 = arith.constant 0 : i32
    return %arg0, %c0_i32 : i32, i32
  }
}

</mosaic_0001>

<llo_original>
// kernel: layernorm_pallas.1
$region0: #{layernorm_pallas.1}
  #allocation0 [shape = 'u32[]', space=smem, size = 0x4, offset = 0x4, fixed_abs, tag = 'smem constant byte address 0x4 - core index']
  #allocation1 [shape = 'u32[144,128]{1,0:T(1,128)}', space=vmem, size = 0x12000, scoped, tag = 'internal scratch']
  %s0 = inlined_call_operand.hbm [shape: f32[16,32], index: 0, kind: input, shape index: {}]
  %s1 = inlined_call_operand.vmem [shape: f32[1,32], index: 1, kind: input, shape index: {}]
  %s2 = inlined_call_operand.vmem [shape: f32[1,32], index: 2, kind: input, shape index: {}]
  %s3 = inlined_call_operand.hbm [shape: f32[16,32], index: 3, kind: output, shape index: {}]
  %s4 = sld [smem:[#allocation0]]
  $region26: #{layernorm_pallas.1} parent=0
    _
  %s6 = ssub.s32 1, %s4
  %s7 = scalar_select 0, %s6, %s4
  $region1: #{layernorm_pallas.1} parent=0
    #allocation2 [shape = 'u8[8192]{0}', space=vmem, size = 0x2000, scoped, tag = 'input window, operand 0, single buffered']
    #allocation3 [shape = 's32[1]{0}', space=sflag, size = 0x4, scoped, tag = 'scoped memory for layernorm_pallas.1']
    #allocation4 [shape = 's32[1]{0}', space=sflag, size = 0x4, scoped, tag = 'scoped memory for layernorm_pallas.1']
    #allocation5 [shape = 'u8[8192]{0}', space=vmem, size = 0x2000, scoped, tag = 'output window, operand 0, single buffered']
    %8 = vsyncpa [#allocation3], 0
    %9 = vsyncpa [#allocation4], 0
    // Predicated region
    $region2: #{layernorm_pallas.1} parent=1 // pred_check
      _
    $region3: #{layernorm_pallas.1} parent=1 // pred_check_branch
      %11 = sbr.rel (0) target = $region5
    $region4: #{layernorm_pallas.1} parent=1 // pred_region
      %s13 = ssub.s32 256, 256
      %14 = vsyncadd [#allocation3], %s13
      %s15 = sshll.u32 [#allocation2], 4
      %s16 = int_to_ptr.vmem [resolvable:$true] %s15
      %21 = dma.hbm_to_vmem [thread:$0]  %s0, 256, %s16, [#allocation3], 128, 128, 8
    $region5: #{layernorm_pallas.1} parent=1 // pred_fallthru
      _
    // Predicated region
    $region6: #{layernorm_pallas.1} parent=1 // pred_check
      _
    $region7: #{layernorm_pallas.1} parent=1 // pred_check_branch
      %23 = sbr.rel (0) target = $region9
    $region8: #{layernorm_pallas.1} parent=1 // pred_region
      _
    $region9: #{layernorm_pallas.1} parent=1 // pred_fallthru
      _
    // Predicated region
    $region10: #{layernorm_pallas.1} parent=1 // pred_check
      _
    $region11: #{layernorm_pallas.1} parent=1 // pred_check_branch
      %25 = sbr.rel (0) target = $region13
    $region12: #{layernorm_pallas.1} parent=1 // pred_region
      _
    $region13: #{layernorm_pallas.1} parent=1 // pred_fallthru
      _
    // Predicated region
    $region14: #{layernorm_pallas.1} parent=1 // pred_check
      _
    $region15: #{layernorm_pallas.1} parent=1 // pred_check_branch
      %27 = sbr.rel (0) target = $region17
    $region16: #{layernorm_pallas.1} parent=1 // pred_region
      %28 = dma.done [#allocation3], 256
    $region17: #{layernorm_pallas.1} parent=1 // pred_fallthru
      _
    %v29 = vld [vmem:[#allocation2] sm:$0xff]
    %v30 = vld [vmem:[#allocation2 + $0x8] sm:$0xff]
    %vm31 = vcmask 261120
    %v32 = vsel %vm31, %v29, 0.0
    %33 = vadd.xlane.f32.xlu0 %v32
    %v34 = vpop.xlane.xlu0 %33
    %v35 = vsel %vm31, %v30, 0.0
    %36 = vadd.xlane.f32.xlu0 %v35
    %v37 = vpop.xlane.xlu0 %36
    %v38 = vmul.f32 %v29, %v29
    %v39 = vmul.f32 %v30, %v30
    %v40 = vsel %vm31, %v38, 0.0
    %41 = vadd.xlane.f32.xlu0 %v40
    %v42 = vpop.xlane.xlu0 %41
    %v43 = vsel %vm31, %v39, 0.0
    %44 = vadd.xlane.f32.xlu0 %v43
    %v45 = vpop.xlane.xlu0 %44
    %v46 = vmul.f32 %v34, 0.03125
    %v47 = vmul.f32 %v37, 0.03125
    %v48 = vmul.f32 %v42, 0.03125
    %v49 = vmul.f32 %v45, 0.03125
    %v50 = vmul.f32 %v46, %v46
    %v51 = vmul.f32 %v47, %v47
    %v52 = vsub.f32 %v48, %v50
    %v53 = vsub.f32 %v49, %v51
    %v54 = vmax.f32 %v52, 0.0
    %v55 = vmax.f32 %v53, 0.0
    %v56 = vadd.f32 %v54, 1e-05
    %v57 = vadd.f32 %v55, 1e-05
    %v58 = vrsqrt.pop %v56
    %v59 = vrsqrt.pop %v57
    %v60 = vld [vmem:[%s1] sm:$0x1]
    %v61 = vld [vmem:[%s2] sm:$0x1]
    %v62 = vsub.f32 %v29, %v46
    %v63 = vsub.f32 %v30, %v47
    %v64 = vmul.f32 %v62, %v58
    %v65 = vmul.f32 %v63, %v59
    %v67 = vlaneseq
    %v68 = vshrl.u32 %v67, 7
    %v69 = vsub.s32 0, %v68
    %v70 = vrot.slane %v60, %v69
    %v72 = vmul.f32 %v64, %v70
    %v73 = vmul.f32 %v65, %v70
    %v75 = vlaneseq
    %v76 = vshrl.u32 %v75, 7
    %v77 = vsub.s32 0, %v76
    %v78 = vrot.slane %v61, %v77
    %v80 = vadd.f32 %v72, %v78
    %v81 = vadd.f32 %v73, %v78
    %82 = vst.msk [vmem:[#allocation5] sm:$0xff] %vm31, %v80
    %83 = vst.msk [vmem:[#allocation5 + $0x8] sm:$0xff] %vm31, %v81
    // Predicated region
    $region18: #{layernorm_pallas.1} parent=1 // pred_check
      _
    $region19: #{layernorm_pallas.1} parent=1 // pred_check_branch
      %85 = sbr.rel (0) target = $region21
    $region20: #{layernorm_pallas.1} parent=1 // pred_region
      %s87 = ssub.s32 256, 256
      %88 = vsyncadd [#allocation4], %s87
      %s89 = sshll.u32 [#allocation5], 4
      %s90 = int_to_ptr.vmem [resolvable:$true] %s89
      %95 = dma.vmem_to_hbm [thread:$0]  %s90, 256, %s3, [#allocation4], 128, 128, 8
    $region21: #{layernorm_pallas.1} parent=1 // pred_fallthru
      _
    // Predicated region
    $region22: #{layernorm_pallas.1} parent=1 // pred_check
      _
    $region23: #{layernorm_pallas.1} parent=1 // pred_check_branch
      %97 = sbr.rel (0) target = $region25
    $region24: #{layernorm_pallas.1} parent=1 // pred_region
      %98 = dma.done [#allocation4], 256
    $region25: #{layernorm_pallas.1} parent=1 // pred_fallthru
      _
    %99 = vsyncpa [#allocation3], 1
    %100 = vsyncpa [#allocation4], 1

</llo_original>
